<compile_context>
chip_gen: v6e
topology: v6e:2x2x1
jax: 0.10.0
libtpu: 0.0.40
codegen_flags: <defaults>
</compile_context>

<pallas_src>
import functools

import jax
import jax.numpy as jnp
from jax.experimental import pallas as pl
from jax.experimental.pallas import tpu as pltpu


def _vmem_capacity_bytes() -> int:
    """Physical VMEM per TensorCore; conservative (v7x-sized) fallback."""
    try:
        info = pltpu.get_tpu_info()
        cap = getattr(info, "vmem_capacity_bytes", None)
        if cap:
            return int(cap)
    except Exception:
        pass
    return 64 * 1024 * 1024


def _logits_margin_kernel(logits_ref, y_ref, out_ref, *,
                          kappa: float, targeted: bool,
                          batch: int, block_b: int):
    i = pl.program_id(0)

    logits = logits_ref[...]                               # (TB, C) input dtype
    y = y_ref[...]                                         # (TB, 1) int32

    # One-hot mask via class-index iota (VPU compare; no gather).
    class_ids = jax.lax.broadcasted_iota(jnp.int32, logits.shape, dimension=1)
    is_target = class_ids == y                             # (TB, C)

    zero = jnp.zeros((), dtype=logits.dtype)
    neg_inf = jnp.array(-jnp.inf, dtype=logits.dtype)

    # Target logit: single nonzero per row -> the sum is exact in any float
    # dtype, so compute in the input dtype and cast only the row result.
    logits_target = jnp.sum(jnp.where(is_target, logits, zero),
                            axis=1, keepdims=True).astype(jnp.float32)
    # Best non-target logit (target lane masked to -inf); max is exact too.
    logits_others = jnp.max(jnp.where(is_target, neg_inf, logits),
                            axis=1, keepdims=True).astype(jnp.float32)

    if targeted:
        margin = logits_others - logits_target
    else:
        margin = logits_target - logits_others

    loss = jnp.maximum(margin, jnp.float32(-kappa))        # (TB, 1) f32

    # Mask rows of the (possibly partial) last block that are past the batch.
    row_ids = i * block_b + jax.lax.broadcasted_iota(jnp.int32, loss.shape, 0)
    loss = jnp.where(row_ids < batch, loss, 0.0)

    partial = jnp.sum(loss)                                # scalar partial sum
    out_ref[...] = jnp.full(out_ref.shape, partial, dtype=jnp.float32)


def logits_margin(logits: jax.Array, y: jax.Array, *, kappa: float = 0.0,
                  targeted: bool = False) -> jax.Array:
    """Pallas TPU implementation of LogitsMargin.forward. Returns scalar f32."""
    B, C = logits.shape
    dtype = logits.dtype
    itemsize = jnp.dtype(dtype).itemsize

    # ---- generation-aware VMEM budget ------------------------------------
    vmem_cap = _vmem_capacity_bytes()
    if vmem_cap <= 64 * 1024 * 1024:        # v7x: 64 MiB VMEM per TC
        vmem_limit = 40 * 1024 * 1024
    else:                                    # v5e / v6e: 128 MiB VMEM
        vmem_limit = 96 * 1024 * 1024

    # Per-row VMEM footprint: double-buffered input block + ~4 word-sized
    # tile-wide temporaries (i32 iota, mask, two where-results), conservative.
    per_row_bytes = C * (2 * itemsize + 16)
    usable = vmem_limit - (4 << 20)          # headroom for labels/output/misc
    tb_max = max(8, (usable // per_row_bytes) // 8 * 8)

    if B <= 8:
        tb = B                               # block equals full batch dim
    else:
        # Ensure >= 2 blocks so the "parallel" axis shards across v7x's 2 TCs.
        half_b = ((int(pl.cdiv(B, 2)) + 7) // 8) * 8
        tb = max(8, min(tb_max, half_b))
    n_blocks = int(pl.cdiv(B, tb))           # partial last block handled by mask

    y2d = y.reshape(B, 1).astype(jnp.int32)

    kernel = functools.partial(_logits_margin_kernel,
                               kappa=float(kappa), targeted=bool(targeted),
                               batch=B, block_b=tb)

    cost = pl.CostEstimate(
        flops=5 * B * C,
        transcendentals=0,
        bytes_accessed=B * C * itemsize + B * 4 + n_blocks * 8 * 128 * 4)

    partials = pl.pallas_call(
        kernel,
        out_shape=jax.ShapeDtypeStruct((n_blocks, 8, 128), jnp.float32),
        grid=(n_blocks,),
        in_specs=[
            pl.BlockSpec((tb, C), lambda i: (i, 0)),   # logits tile (full C)
            pl.BlockSpec((tb, 1), lambda i: (i, 0)),   # labels tile
        ],
        out_specs=pl.BlockSpec((1, 8, 128), lambda i: (i, 0, 0)),
        compiler_params=pltpu.CompilerParams(
            dimension_semantics=("parallel",),
            vmem_limit_bytes=int(vmem_limit)),
        cost_estimate=cost,
    )(logits, y2d)

    # Final reduction (sum of per-block partials) + mean in XLA.
    return jnp.sum(partials[:, 0, 0]) / jnp.float32(B)


def _reference(logits, y, *, kappa=0.0, targeted=False):
    """Plain-JAX reference mirroring the PyTorch forward."""
    C = logits.shape[1]
    one_hots = jax.nn.one_hot(y, C, dtype=jnp.float32)
    lg = logits.astype(jnp.float32)
    logits_target = jnp.sum(one_hots * lg, axis=1)
    logits_masked = jnp.where(one_hots == 1, -jnp.inf, lg)
    logits_others = jnp.max(logits_masked, axis=1)
    if targeted:
        loss = jnp.maximum(logits_others - logits_target, -kappa)
    else:
        loss = jnp.maximum(logits_target - logits_others, -kappa)
    return jnp.mean(loss)


if __name__ == "__main__":
    key = jax.random.PRNGKey(0)
    kappa = 0.5

    # (B, C, dtype) cases: full-dim single block, ragged B with partial last
    # block, and bf16 with a non-128-multiple vocab (no padding anywhere).
    cases = [(2, 16, jnp.float32), (10, 40, jnp.float32), (16, 257, jnp.bfloat16)]
    for B, C, dt in cases:
        k1, k2, key = jax.random.split(key, 3)
        logits = jax.random.normal(k1, (B, C), dtype=jnp.float32).astype(dt)
        y = jax.random.randint(k2, (B,), 0, C, dtype=jnp.int32)

        for targeted in (False, True):
            got = logits_margin(logits, y, kappa=kappa, targeted=targeted)
            got = jax.block_until_ready(got)
            want = _reference(logits, y, kappa=kappa, targeted=targeted)
            assert jnp.allclose(got, want, atol=1e-5, rtol=1e-5), (
                B, C, dt, targeted, got, want)

    print("KERNEL_OK")
</pallas_src>

<mosaic_0001>
module attributes {stable_mosaic.version = 11 : i64} {
  func.func @_logits_margin_kernel(%arg0: i32, %arg1: memref<2x16xf32, #tpu.memory_space<vmem>>, %arg2: memref<2x1xi32, #tpu.memory_space<vmem>>, %arg3: memref<1x8x128xf32, #tpu.memory_space<vmem>>) attributes {dimension_semantics = [#tpu.dimension_semantics<parallel>], iteration_bounds = array<i64: 1>, scalar_prefetch = 0 : i64, scratch_operands = 0 : i64, tpu.core_type = #tpu.core_type<tc>, window_params = [{transform_indices = @transform_0, window_bounds = array<i64: 2, 16>}, {transform_indices = @transform_1, window_bounds = array<i64: 2, 1>}, {transform_indices = @transform_2, window_bounds = array<i64: 1, 8, 128>}]} {
    %c0 = arith.constant 0 : index
    %c0_0 = arith.constant 0 : index
    %0 = vector.load %arg1[%c0, %c0_0] : memref<2x16xf32, #tpu.memory_space<vmem>>, vector<2x16xf32>
    %c0_1 = arith.constant 0 : index
    %c0_2 = arith.constant 0 : index
    %1 = vector.load %arg2[%c0_1, %c0_2] : memref<2x1xi32, #tpu.memory_space<vmem>>, vector<2x1xi32>
    %2 = tpu.iota {dimensions = array<i32: 1>} : vector<2x16xi32>
    %3 = vector.broadcast %1 : vector<2x1xi32> to vector<2x16xi32>
    %4 = arith.cmpi eq, %2, %3 : vector<2x16xi32>
    %cst = arith.constant 0.000000e+00 : f32
    %5 = vector.broadcast %cst : f32 to vector<2x16xf32>
    %6 = arith.select %4, %0, %5 : vector<2x16xi1>, vector<2x16xf32>
    %cst_3 = arith.constant dense<0.000000e+00> : vector<2xf32>
    %7 = vector.multi_reduction <add>, %6, %cst_3 [1] : vector<2x16xf32> to vector<2xf32>
    %8 = vector.shape_cast %7 : vector<2xf32> to vector<2x1xf32>
    %cst_4 = arith.constant 0xFF800000 : f32
    %9 = vector.broadcast %cst_4 : f32 to vector<2x16xf32>
    %10 = arith.select %4, %9, %0 : vector<2x16xi1>, vector<2x16xf32>
    %cst_5 = arith.constant dense<0xFF800000> : vector<2xf32>
    %11 = vector.multi_reduction <maximumf>, %10, %cst_5 [1] : vector<2x16xf32> to vector<2xf32>
    %12 = vector.shape_cast %11 : vector<2xf32> to vector<2x1xf32>
    %13 = arith.subf %8, %12 : vector<2x1xf32>
    %cst_6 = arith.constant -5.000000e-01 : f32
    %14 = vector.broadcast %cst_6 : f32 to vector<2x1xf32>
    %15 = arith.maximumf %13, %14 : vector<2x1xf32>
    %c2_i32 = arith.constant 2 : i32
    %16 = arith.muli %arg0, %c2_i32 : i32
    %17 = tpu.iota {dimensions = array<i32: 0>} : vector<2x1xi32>
    %18 = vector.broadcast %16 : i32 to vector<2x1xi32>
    %19 = arith.addi %18, %17 : vector<2x1xi32>
    %c2_i32_7 = arith.constant 2 : i32
    %20 = vector.broadcast %c2_i32_7 : i32 to vector<2x1xi32>
    %21 = arith.cmpi slt, %19, %20 : vector<2x1xi32>
    %cst_8 = arith.constant 0.000000e+00 : f32
    %22 = vector.broadcast %cst_8 : f32 to vector<2x1xf32>
    %23 = arith.select %21, %15, %22 : vector<2x1xi1>, vector<2x1xf32>
    %24 = vector.shape_cast %23 : vector<2x1xf32> to vector<1x2x1xf32>
    %cst_9 = arith.constant dense<0.000000e+00> : vector<1xf32>
    %25 = vector.multi_reduction <add>, %24, %cst_9 [1, 2] : vector<1x2x1xf32> to vector<1xf32>
    %26 = vector.shape_cast %25 : vector<1xf32> to vector<1x1x1xf32>
    %27 = vector.extract %26[0, 0, 0] : f32 from vector<1x1x1xf32>
    %28 = vector.broadcast %27 : f32 to vector<1x8x128xf32>
    %c0_10 = arith.constant 0 : index
    %c0_11 = arith.constant 0 : index
    %c0_12 = arith.constant 0 : index
    %29 = vector.load %arg3[%c0_10, %c0_11, %c0_12] : memref<1x8x128xf32, #tpu.memory_space<vmem>>, vector<1x8x128xf32>
    tpu.vector_store %arg3[%c0_10, %c0_11, %c0_12], %28 {strides = array<i32>} : memref<1x8x128xf32, #tpu.memory_space<vmem>>, vector<1x8x128xf32>,
    return
  }
  func.func @transform_0(%arg0: i32) -> (i32, i32) {
    %c0_i32 = arith.constant 0 : i32
    %c0_i32_0 = arith.constant 0 : i32
    return %arg0, %c0_i32 : i32, i32
  }
  func.func @transform_1(%arg0: i32) -> (i32, i32) {
    %c0_i32 = arith.constant 0 : i32
    %c0_i32_0 = arith.constant 0 : i32
    return %arg0, %c0_i32 : i32, i32
  }
  func.func @transform_2(%arg0: i32) -> (i32, i32, i32) {
    %c0_i32 = arith.constant 0 : i32
    %c0_i32_0 = arith.constant 0 : i32
    %c0_i32_1 = arith.constant 0 : i32
    return %arg0, %c0_i32, %c0_i32_0 : i32, i32, i32
  }
}

</mosaic_0001>

<llo_original>
// kernel: tpu_custom_call.1
$region0: #{tpu_custom_call.1}
  #allocation0 [shape = 'u32[]', space=smem, size = 0x4, offset = 0x4, fixed_abs, tag = 'smem constant byte address 0x4 - core index']
  #allocation1 [shape = 'u32[144,128]{1,0:T(1,128)}', space=vmem, size = 0x12000, scoped, tag = 'internal scratch']
  %s0 = inlined_call_operand.vmem [shape: f32[2,16], index: 0, kind: input, shape index: {}]
  %s1 = inlined_call_operand.vmem [shape: s32[2,1], index: 1, kind: input, shape index: {}]
  %s2 = inlined_call_operand.hbm [shape: f32[1,8,128], index: 2, kind: output, shape index: {}]
  %s3 = sld [smem:[#allocation0]]
  $region18: #{tpu_custom_call.1} parent=0
    _
  %s5 = ssub.s32 1, %s3
  %s6 = scalar_select 0, %s5, %s3
  $region1: #{tpu_custom_call.1} parent=0
    #allocation2 [shape = 'u8[4096]{0}', space=vmem, size = 0x1000, scoped, tag = 'output window, operand 0, single buffered']
    #allocation3 [shape = 's32[1]{0}', space=sflag, size = 0x4, scoped, tag = 'scoped memory for tpu_custom_call.1']
    %7 = vsyncpa [#allocation3], 0
    // Predicated region
    $region2: #{tpu_custom_call.1} parent=1 // pred_check
      _
    $region3: #{tpu_custom_call.1} parent=1 // pred_check_branch
      %9 = sbr.rel (0) target = $region5
    $region4: #{tpu_custom_call.1} parent=1 // pred_region
      _
    $region5: #{tpu_custom_call.1} parent=1 // pred_fallthru
      _
    // Predicated region
    $region6: #{tpu_custom_call.1} parent=1 // pred_check
      _
    $region7: #{tpu_custom_call.1} parent=1 // pred_check_branch
      %11 = sbr.rel (0) target = $region9
    $region8: #{tpu_custom_call.1} parent=1 // pred_region
      _
    $region9: #{tpu_custom_call.1} parent=1 // pred_fallthru
      _
    %v12 = vld [vmem:[%s0] sm:$0x3]
    %v13 = vld [vmem:[%s1] sm:$0x3]
    %v14 = vlaneseq
    %v15 = vand.u32 %v14, 127
    %16 = vset.pattern.permute.xlu0 0
    %17 = vperm.xlu0 %16, %v13
    %v18 = vpop.permute.xlu0 %17
    %vm19 = vcmp.eq.s32.totalorder %v15, %v18
    %v20 = vsel %vm19, %v12, 0.0
    %vm21 = vcmask 123904
    %v22 = vsel %vm21, %v20, 0.0
    %23 = vadd.xlane.f32.xlu0 %v22
    %v24 = vpop.xlane.xlu0 %23
    %v25 = vsel %vm19, -inf, %v12
    %v26 = vsel %vm21, %v25, -inf
    %27 = vmax.xlane.f32.xlu0 %v26
    %v28 = vpop.xlane.xlu0 %27
    %v29 = vsub.f32 %v24, %v28
    %v30 = vmax.f32 %v29, -0.5
    %s31 = smul.u32 0, 2
    %v32 = vlaneseq
    %v33 = vshrl.u32 %v32, 7
    %v34 = vstv %s31
    %v35 = vadd.s32 %v34, %v33
    %vm36 = vcmp.lt.s32.totalorder %v35, 2
    %v37 = vsel %vm36, %v30, 0.0
    %vm38 = vcmask 1024
    %v39 = vsel %vm38, %v37, 0.0
    %40 = vadd.xlane.f32.xlu0 %v39
    %v41 = vpop.xlane.xlu0 %40
    %v42 = vrot.slane %v41, 4
    %v43 = vadd.f32 %v41, %v42
    %v44 = vrot.slane %v43, 2
    %v45 = vadd.f32 %v43, %v44
    %v46 = vrot.slane %v45, 1
    %v47 = vadd.f32 %v45, %v46
    %s48 = vtos %v47
    %v49 = vstv %s48
    %50 = vst [vmem:[#allocation2] sm:$0xff] %v49
    // Predicated region
    $region10: #{tpu_custom_call.1} parent=1 // pred_check
      _
    $region11: #{tpu_custom_call.1} parent=1 // pred_check_branch
      %52 = sbr.rel (0) target = $region13
    $region12: #{tpu_custom_call.1} parent=1 // pred_region
      %s54 = ssub.s32 128, 128
      %55 = vsyncadd [#allocation3], %s54
      %s57 = sshll.u32 [#allocation2], 4
      %s58 = int_to_ptr.vmem [resolvable:$true] %s57
      %60 = dma.vmem_to_hbm [thread:$0]  %s58, 128, %s2, [#allocation3]
    $region13: #{tpu_custom_call.1} parent=1 // pred_fallthru
      _
    // Predicated region
    $region14: #{tpu_custom_call.1} parent=1 // pred_check
      _
    $region15: #{tpu_custom_call.1} parent=1 // pred_check_branch
      %62 = sbr.rel (0) target = $region17
    $region16: #{tpu_custom_call.1} parent=1 // pred_region
      %63 = dma.done [#allocation3], 128
    $region17: #{tpu_custom_call.1} parent=1 // pred_fallthru
      _
    %64 = vsyncpa [#allocation3], 1

</llo_original>
